<compile_context>
chip_gen: v6e
topology: v6e:2x2x1
jax: 0.10.0
libtpu: 0.0.40
codegen_flags: <defaults>
</compile_context>

<pallas_src>
import jax
import jax.numpy as jnp
from jax.experimental import pallas as pl
from jax.experimental.pallas import tpu as pltpu


_LANE = 128   # lanes per vreg (last dim)


def _round_up(a: int, b: int) -> int:
    return -(-a // b) * b


def _vmem_budgets():
    """(pipeline_budget_bytes, vmem_limit_bytes) sized per TPU generation."""
    try:
        phys = int(pltpu.get_tpu_info().vmem_capacity_bytes)
    except Exception:
        phys = 64 * 1024 * 1024  # conservative: assume v7x-sized per-TC VMEM
    if phys >= 100 * 1024 * 1024:
        # v5e / v6e: 128 MiB physical -> big blocks are free wins.
        return 48 * 1024 * 1024, 64 * 1024 * 1024
    # v7x (64 MiB per TC) or unknown-small: keep scoped limit <= ~48 MiB.
    return 36 * 1024 * 1024, 48 * 1024 * 1024


def _vmem_tile_bytes_3d(h: int, w: int, itemsize: int) -> int:
    """Per-(n,c)-image VMEM bytes of one (h, w) tile, with (sublane, lane) padding."""
    sublane = max(8, 32 // max(itemsize, 1))  # 8 for f32, 16 for bf16, 32 for int8
    return _round_up(h, sublane) * _round_up(w, _LANE) * itemsize


def _balance_steps(total: int, tile: int, align: int = 1) -> int:
    """Best-effort: shrink tile so the grid-step count is even (v7x 2-TC load balance)."""
    steps = -(-total // tile)
    if steps > 1 and steps % 2 == 1:
        cand = -(-total // (steps + 1))
        cand = _round_up(max(cand, 1), align)
        cand = min(cand, tile)
        if cand >= 1 and (-(-total // cand)) % 2 == 0:
            return cand
    return tile


def _make_crop3d_kernel(pad_top: int, pad_left: int, h_out: int, w_out: int):
    """General H+W crop: copy a static (h_out, w_out) window starting at (pad_top, pad_left)."""

    def crop_kernel(x_ref, o_ref):
        # x_ref: (TILE_NC, H_in, W_in) ; o_ref: (TILE_NC, H_out, W_out).
        # TODO(synk): on v7x (3.2 TB/s HBM) the masked vst at w_out/128 lane occupancy — not
        #             the DMA — is the binding slot for small w_out; a lane-dense repack via
        #             pltpu.roll/select would close that gap.
        o_ref[...] = x_ref[:, pad_top:pad_top + h_out, pad_left:pad_left + w_out]

    return crop_kernel


def _make_crop_flat_kernel(start: int, length: int):
    """H-only crop on flattened (H*W) lane axis: contiguous slice, full-width unmasked stores."""

    def crop_kernel(x_ref, o_ref):
        # x_ref: (TILE_NC, H_in*W) ; o_ref: (TILE_NC, H_out*W).
        o_ref[...] = x_ref[:, start:start + length]

    return crop_kernel


def conv_transpose2d_same_pad(x: jax.Array, output_size) -> jax.Array:
    """Pallas implementation of ConvTranspose2dSamePad.forward.

    Args:
      x: (N, C, H_in, W_in) array.
      output_size: static (H_out, W_out) target spatial size (H_out <= H_in, W_out <= W_in).
    Returns:
      (N, C, H_out, W_out) cropped array, same dtype as x.
    """
    n, c, h_in, w_in = x.shape
    h_out, w_out = int(output_size[0]), int(output_size[1])

    if h_out > h_in or w_out > w_in:
        raise ValueError(
            f"output_size {output_size} must not exceed input spatial size ({h_in}, {w_in}); "
            "ConvTranspose2dSamePad only deletes rows/columns."
        )

    pad_top = (h_in - h_out) // 2
    pad_left = (w_in - w_out) // 2

    # --- Identity fast path: nothing to crop, skip the HBM round trip entirely. ---
    if h_out == h_in and w_out == w_in:
        return x

    nc = n * c
    itemsize = jnp.dtype(x.dtype).itemsize
    pipeline_budget, vmem_limit = _vmem_budgets()

    cost = pl.CostEstimate(
        flops=0,
        transcendentals=0,
        bytes_accessed=nc * (h_in * w_in + h_out * w_out) * itemsize,
    )

    # --- Lane-dense fast path: H-only crop (full-width rows stay contiguous when flattened). ---
    if pad_left == 0 and w_out == w_in:
        flat_in = h_in * w_in
        flat_out = h_out * w_in
        in_tile = _round_up(flat_in, _LANE) * itemsize
        out_tile = _round_up(flat_out, _LANE) * itemsize
        per_nc_bytes = 2 * (in_tile + out_tile)          # double-buffered in + out
        tile_nc = max(1, min(nc, pipeline_budget // per_nc_bytes))
        if tile_nc >= nc:
            tile_nc = nc                                  # full dim -> always layout-legal
        else:
            # Keep the sublane (second-to-last) block dim 8-aligned for clean layout.
            tile_nc = min(nc, max(8, (tile_nc // 8) * 8))
            tile_nc = _balance_steps(nc, tile_nc, align=8)

        grid = (pl.cdiv(nc, tile_nc),)
        kernel = _make_crop_flat_kernel(pad_top * w_in, flat_out)

        out_flat = pl.pallas_call(
            kernel,
            out_shape=jax.ShapeDtypeStruct((nc, flat_out), x.dtype),
            grid_spec=pltpu.PrefetchScalarGridSpec(
                num_scalar_prefetch=0,
                grid=grid,
                in_specs=[pl.BlockSpec((tile_nc, flat_in), lambda i: (i, 0))],
                out_specs=pl.BlockSpec((tile_nc, flat_out), lambda i: (i, 0)),
            ),
            compiler_params=pltpu.CompilerParams(
                dimension_semantics=("parallel",),        # megacore / 2-TC sharding of N*C
                vmem_limit_bytes=vmem_limit,
            ),
            cost_estimate=cost,
        )(x.reshape(nc, flat_in))
        return out_flat.reshape(n, c, h_out, w_out)

    # --- General H+W crop path. ---
    in_tile = _vmem_tile_bytes_3d(h_in, w_in, itemsize)
    out_tile = _vmem_tile_bytes_3d(h_out, w_out, itemsize)
    per_nc_bytes = 2 * (in_tile + out_tile)               # double-buffered in + out (no phantom slice buf)
    tile_nc = max(1, min(nc, pipeline_budget // per_nc_bytes))
    tile_nc = _balance_steps(nc, tile_nc)
    # TODO(synk): for very large single images (per-image tile > budget at tile_nc=1) also tile H
    #             so the kernel degrades gracefully instead of relying on the raised vmem limit.

    grid = (pl.cdiv(nc, tile_nc),)
    kernel = _make_crop3d_kernel(pad_top, pad_left, h_out, w_out)

    out_flat = pl.pallas_call(
        kernel,
        out_shape=jax.ShapeDtypeStruct((nc, h_out, w_out), x.dtype),
        grid_spec=pltpu.PrefetchScalarGridSpec(
            num_scalar_prefetch=0,
            grid=grid,
            in_specs=[
                # Full H_in x W_in per image -> trailing block dims equal array dims (always legal).
                pl.BlockSpec((tile_nc, h_in, w_in), lambda i: (i, 0, 0)),
            ],
            out_specs=pl.BlockSpec((tile_nc, h_out, w_out), lambda i: (i, 0, 0)),
        ),
        compiler_params=pltpu.CompilerParams(
            dimension_semantics=("parallel",),
            vmem_limit_bytes=vmem_limit,
        ),
        cost_estimate=cost,
    )(x.reshape(nc, h_in, w_in))

    return out_flat.reshape(n, c, h_out, w_out)


def _reference(x, output_size):
    h_in, w_in = x.shape[2], x.shape[3]
    pad_h = h_in - output_size[0]
    pad_w = w_in - output_size[1]
    pt, pb = pad_h // 2, pad_h - pad_h // 2
    pleft, pright = pad_w // 2, pad_w - pad_w // 2
    return x[:, :, pt:h_in - pb, pleft:w_in - pright]


if __name__ == "__main__":
    key = jax.random.PRNGKey(0)
    k1, k2, k3 = jax.random.split(key, 3)

    # Case 1: typical ConvTranspose2d(stride=2, kernel=3) on an 8x8 map -> 17x17, SAME-crop to 16x16
    # (odd pad: pad_top=0, pad_left=0 -> crop bottom/right only). General H+W crop path.
    x1 = jax.random.normal(k1, (2, 4, 17, 17), dtype=jnp.float32)
    out1 = jax.block_until_ready(conv_transpose2d_same_pad(x1, (16, 16)))
    assert out1.shape == (2, 4, 16, 16)
    assert jnp.array_equal(out1, _reference(x1, (16, 16)))

    # Case 2: nonzero pad_top/pad_left with asymmetric crop (pad_h=2 -> 1/1, pad_w=3 -> 1/2).
    x2 = jax.random.normal(k2, (2, 4, 18, 19), dtype=jnp.float32)
    out2 = jax.block_until_ready(conv_transpose2d_same_pad(x2, (16, 16)))
    assert out2.shape == (2, 4, 16, 16)
    assert jnp.array_equal(out2, _reference(x2, (16, 16)))

    # Case 3: H-only crop -> lane-dense flattened fast path.
    x3 = jax.random.normal(k3, (2, 4, 18, 16), dtype=jnp.float32)
    out3 = jax.block_until_ready(conv_transpose2d_same_pad(x3, (16, 16)))
    assert out3.shape == (2, 4, 16, 16)
    assert jnp.array_equal(out3, _reference(x3, (16, 16)))

    # Case 4: identity fast path (no crop at all).
    x4 = jax.random.normal(k1, (2, 4, 16, 16), dtype=jnp.float32)
    out4 = jax.block_until_ready(conv_transpose2d_same_pad(x4, (16, 16)))
    assert out4.shape == (2, 4, 16, 16)
    assert jnp.array_equal(out4, x4)

    print("KERNEL_OK")
</pallas_src>

<mosaic_0001>
module attributes {stable_mosaic.version = 11 : i64} {
  func.func @crop_kernel(%arg0: i32, %arg1: memref<8x17x17xf32, #tpu.memory_space<vmem>>, %arg2: memref<8x16x16xf32, #tpu.memory_space<vmem>>) attributes {dimension_semantics = [#tpu.dimension_semantics<parallel>], iteration_bounds = array<i64: 1>, scalar_prefetch = 0 : i64, scratch_operands = 0 : i64, tpu.core_type = #tpu.core_type<tc>, window_params = [{transform_indices = @transform_0, window_bounds = array<i64: 8, 17, 17>}, {transform_indices = @transform_1, window_bounds = array<i64: 8, 16, 16>}]} {
    %c0 = arith.constant 0 : index
    %c0_0 = arith.constant 0 : index
    %c0_1 = arith.constant 0 : index
    %0 = vector.load %arg1[%c0, %c0_0, %c0_1] : memref<8x17x17xf32, #tpu.memory_space<vmem>>, vector<8x16x16xf32>
    %c0_2 = arith.constant 0 : index
    %c0_3 = arith.constant 0 : index
    %c0_4 = arith.constant 0 : index
    %1 = vector.load %arg2[%c0_2, %c0_3, %c0_4] : memref<8x16x16xf32, #tpu.memory_space<vmem>>, vector<8x16x16xf32>
    tpu.vector_store %arg2[%c0_2, %c0_3, %c0_4], %0 {strides = array<i32>} : memref<8x16x16xf32, #tpu.memory_space<vmem>>, vector<8x16x16xf32>,
    return
  }
  func.func @transform_0(%arg0: i32) -> (i32, i32, i32) {
    %c0_i32 = arith.constant 0 : i32
    %c0_i32_0 = arith.constant 0 : i32
    %c0_i32_1 = arith.constant 0 : i32
    return %arg0, %c0_i32, %c0_i32_0 : i32, i32, i32
  }
  func.func @transform_1(%arg0: i32) -> (i32, i32, i32) {
    %c0_i32 = arith.constant 0 : i32
    %c0_i32_0 = arith.constant 0 : i32
    %c0_i32_1 = arith.constant 0 : i32
    return %arg0, %c0_i32, %c0_i32_0 : i32, i32, i32
  }
}

</mosaic_0001>

<llo_original>
// kernel: tpu_custom_call.1
$region0: #{tpu_custom_call.1}
  #allocation0 [shape = 'u32[]', space=smem, size = 0x4, offset = 0x4, fixed_abs, tag = 'smem constant byte address 0x4 - core index']
  #allocation1 [shape = 'u32[144,128]{1,0:T(1,128)}', space=vmem, size = 0x12000, scoped, tag = 'internal scratch']
  %s0 = inlined_call_operand.vmem [shape: f32[8,17,17], index: 0, kind: input, shape index: {}]
  %s1 = inlined_call_operand.hbm [shape: f32[8,16,16], index: 1, kind: output, shape index: {}]
  %s2 = sld [smem:[#allocation0]]
  $region14: #{tpu_custom_call.1} parent=0
    _
  %s4 = ssub.s32 1, %s2
  %s5 = scalar_select 0, %s4, %s2
  $region1: #{tpu_custom_call.1} parent=0
    #allocation2 [shape = 'u8[65536]{0}', space=vmem, size = 0x10000, scoped, tag = 'output window, operand 0, single buffered']
    #allocation3 [shape = 's32[1]{0}', space=sflag, size = 0x4, scoped, tag = 'scoped memory for tpu_custom_call.1']
    %6 = vsyncpa [#allocation3], 0
    // Predicated region
    $region2: #{tpu_custom_call.1} parent=1 // pred_check
      _
    $region3: #{tpu_custom_call.1} parent=1 // pred_check_branch
      %8 = sbr.rel (0) target = $region5
    $region4: #{tpu_custom_call.1} parent=1 // pred_region
      _
    $region5: #{tpu_custom_call.1} parent=1 // pred_fallthru
      _
    %v9 = vld [vmem:[%s0] sm:$0xff]
    %v10 = vld [vmem:[%s0 + $0x8] sm:$0xff]
    %v11 = vld [vmem:[%s0 + $0x18] sm:$0xff]
    %v12 = vld [vmem:[%s0 + $0x20] sm:$0xff]
    %v13 = vld [vmem:[%s0 + $0x30] sm:$0xff]
    %v14 = vld [vmem:[%s0 + $0x38] sm:$0xff]
    %v15 = vld [vmem:[%s0 + $0x48] sm:$0xff]
    %v16 = vld [vmem:[%s0 + $0x50] sm:$0xff]
    %v17 = vld [vmem:[%s0 + $0x60] sm:$0xff]
    %v18 = vld [vmem:[%s0 + $0x68] sm:$0xff]
    %v19 = vld [vmem:[%s0 + $0x78] sm:$0xff]
    %v20 = vld [vmem:[%s0 + $0x80] sm:$0xff]
    %v21 = vld [vmem:[%s0 + $0x90] sm:$0xff]
    %v22 = vld [vmem:[%s0 + $0x98] sm:$0xff]
    %v23 = vld [vmem:[%s0 + $0xa8] sm:$0xff]
    %v24 = vld [vmem:[%s0 + $0xb0] sm:$0xff]
    %vm25 = vcmask 130048
    %26 = vst.msk [vmem:[#allocation2] sm:$0xff] %vm25, %v9
    %27 = vst.msk [vmem:[#allocation2 + $0x8] sm:$0xff] %vm25, %v10
    %28 = vst.msk [vmem:[#allocation2 + $0x10] sm:$0xff] %vm25, %v11
    %29 = vst.msk [vmem:[#allocation2 + $0x18] sm:$0xff] %vm25, %v12
    %30 = vst.msk [vmem:[#allocation2 + $0x20] sm:$0xff] %vm25, %v13
    %31 = vst.msk [vmem:[#allocation2 + $0x28] sm:$0xff] %vm25, %v14
    %32 = vst.msk [vmem:[#allocation2 + $0x30] sm:$0xff] %vm25, %v15
    %33 = vst.msk [vmem:[#allocation2 + $0x38] sm:$0xff] %vm25, %v16
    %34 = vst.msk [vmem:[#allocation2 + $0x40] sm:$0xff] %vm25, %v17
    %35 = vst.msk [vmem:[#allocation2 + $0x48] sm:$0xff] %vm25, %v18
    %36 = vst.msk [vmem:[#allocation2 + $0x50] sm:$0xff] %vm25, %v19
    %37 = vst.msk [vmem:[#allocation2 + $0x58] sm:$0xff] %vm25, %v20
    %38 = vst.msk [vmem:[#allocation2 + $0x60] sm:$0xff] %vm25, %v21
    %39 = vst.msk [vmem:[#allocation2 + $0x68] sm:$0xff] %vm25, %v22
    %40 = vst.msk [vmem:[#allocation2 + $0x70] sm:$0xff] %vm25, %v23
    %41 = vst.msk [vmem:[#allocation2 + $0x78] sm:$0xff] %vm25, %v24
    // Predicated region
    $region6: #{tpu_custom_call.1} parent=1 // pred_check
      _
    $region7: #{tpu_custom_call.1} parent=1 // pred_check_branch
      %43 = sbr.rel (0) target = $region9
    $region8: #{tpu_custom_call.1} parent=1 // pred_region
      %s45 = ssub.s32 2048, 2048
      %46 = vsyncadd [#allocation3], %s45
      %s47 = sshll.u32 [#allocation2], 4
      %s48 = int_to_ptr.vmem [resolvable:$true] %s47
      %53 = dma.vmem_to_hbm [thread:$0]  %s48, 2048, %s1, [#allocation3], 128, 128, 8
    $region9: #{tpu_custom_call.1} parent=1 // pred_fallthru
      _
    // Predicated region
    $region10: #{tpu_custom_call.1} parent=1 // pred_check
      _
    $region11: #{tpu_custom_call.1} parent=1 // pred_check_branch
      %55 = sbr.rel (0) target = $region13
    $region12: #{tpu_custom_call.1} parent=1 // pred_region
      %56 = dma.done [#allocation3], 2048
    $region13: #{tpu_custom_call.1} parent=1 // pred_fallthru
      _
    %57 = vsyncpa [#allocation3], 1

</llo_original>
